<compile_context>
chip_gen: v7x
topology: tpu7x:2x2x1
jax: 0.10.0
libtpu: 0.0.40
codegen_flags: <defaults>
</compile_context>

<pallas_src>
import functools

import jax
import jax.numpy as jnp
from jax.experimental import pallas as pl
from jax.experimental.pallas import tpu as pltpu


# ----------------------------------------------------------------------------
# Kernel: one flattened padded image (Cin, Hp*Wp) resident in VMEM.
# Builds the (k*k*Cin, H*Wp) patch slab with static lane-offset slices, then
# does a single fused matmul  W(Cout, K) @ slab(K, H*Wp)  + bias.
# ----------------------------------------------------------------------------
def _conv_fused_kernel(x_ref, w_ref, b_ref, o_ref, slab_ref, *, ksize, wp, out_len):
    cin = x_ref.shape[0]

    # Patch slab: row (tap*Cin + ci) = x_flat[ci, tap_off : tap_off + H*Wp],
    # tap_off = kh*Wp + kw.  Pure static slices along the lane dim; the pieces
    # are written into the f32 scratch at static sublane offsets.
    for kh in range(ksize):
        for kw in range(ksize):
            tap = kh * ksize + kw
            off = kh * wp + kw
            slab_ref[tap * cin:(tap + 1) * cin, :] = (
                x_ref[:, off:off + out_len].astype(jnp.float32))

    # Single MXU contraction over K = k*k*Cin, f32 accumulation.
    acc = jnp.dot(w_ref[...], slab_ref[...], preferred_element_type=jnp.float32)

    # Fused bias add (broadcast over the lane-dense spatial axis).
    o_ref[...] = (acc + b_ref[...]).astype(o_ref.dtype)


@functools.partial(jax.jit, static_argnames=("ksize", "padding"))
def my_convo2d_forward(x_nchw, weight, bias, *, ksize, padding):
    """Conv2d forward, stride=1, padding=(k-1)//2, with bias.

    x_nchw : [N, Cin, H, W]    (PyTorch NCHW layout)
    weight : [Cout, Cin, k, k] (PyTorch OIHW layout)
    bias   : [Cout]
    returns: [N, Cout, H, W]
    """
    assert ksize % 2 == 1, "same-shape conv requires odd kernel_size"
    n, cin, h, w = x_nchw.shape
    cout = weight.shape[0]
    wp = w + 2 * padding
    hp = h + 2 * padding + 1          # one extra zero row keeps the last tap's
                                      # flat slice in bounds
    out_len = h * wp                  # kernel output columns (incl. wrap cols)
    kk_cin = ksize * ksize * cin

    # Glue: spatial zero-pad (+1 extra bottom row) and bf16 cast, then a free
    # reshape of the contiguous NCHW array to (N, Cin, Hp*Wp).  No transpose.
    x_pad = jnp.pad(x_nchw, ((0, 0), (0, 0),
                             (padding, padding + 1), (padding, padding)))
    x_flat = x_pad.astype(jnp.bfloat16).reshape(n, cin, hp * wp)

    # Weights OIHW -> (Cout, kh, kw, Cin) -> (Cout, k*k*Cin); the column order
    # (kh*k + kw)*Cin + ci matches the slab row order.  Tiny -> keep f32.
    w_mat = jnp.transpose(weight, (0, 2, 3, 1)).reshape(cout, kk_cin)
    w_mat = w_mat.astype(jnp.float32)
    b_col = bias.astype(jnp.float32).reshape(cout, 1)

    cost = pl.CostEstimate(
        flops=2 * n * out_len * kk_cin * cout,
        transcendentals=0,
        bytes_accessed=(n * cin * hp * wp * 2      # bf16 activations
                        + cout * kk_cin * 4
                        + cout * 4
                        + n * cout * out_len * 4),  # f32 output
    )

    out_flat = pl.pallas_call(
        functools.partial(_conv_fused_kernel, ksize=ksize, wp=wp, out_len=out_len),
        out_shape=jax.ShapeDtypeStruct((n, cout, out_len), jnp.float32),
        grid=(n,),
        in_specs=[
            # one flattened padded image per grid step (batch dim squeezed)
            pl.BlockSpec((None, cin, hp * wp), lambda i: (i, 0, 0)),
            # weight matrix: resident across the whole grid
            pl.BlockSpec((cout, kk_cin), lambda i: (0, 0)),
            # bias column: resident
            pl.BlockSpec((cout, 1), lambda i: (0, 0)),
        ],
        out_specs=pl.BlockSpec((None, cout, out_len), lambda i: (i, 0, 0)),
        scratch_shapes=[pltpu.VMEM((kk_cin, out_len), jnp.float32)],
        compiler_params=pltpu.CompilerParams(
            dimension_semantics=("parallel",),
            vmem_limit_bytes=48 * 1024 * 1024,
        ),
        cost_estimate=cost,
    )(x_flat, w_mat, b_col)

    # (N, Cout, H*Wp) -> (N, Cout, H, Wp) -> drop the Wp-W wrap columns.
    # Already NCHW: no output transpose.
    return out_flat.reshape(n, cout, h, wp)[:, :, :, :w]


if __name__ == "__main__":
    # MyConvo2d(input_dim=4, output_dim=8, kernel_size=3, stride=1, bias=True)
    input_dim, output_dim, kernel_size = 4, 8, 3
    padding = (kernel_size - 1) // 2

    key = jax.random.PRNGKey(0)
    kx, kw_key, kb = jax.random.split(key, 3)

    x = jax.random.normal(kx, (2, input_dim, 16, 16), jnp.float32)       # NCHW
    weight = jax.random.normal(
        kw_key, (output_dim, input_dim, kernel_size, kernel_size), jnp.float32
    ) * 0.1
    bias = jax.random.normal(kb, (output_dim,), jnp.float32) * 0.1

    out = my_convo2d_forward(x, weight, bias, ksize=kernel_size, padding=padding)
    out = jax.block_until_ready(out)

    # Reference check against XLA's conv (NCHW, OIHW).  Tolerance loosened for
    # the bf16 activation cast inside the kernel (f32 accumulation, f32 weights).
    ref = jax.lax.conv_general_dilated(
        x, weight, window_strides=(1, 1),
        padding=((padding, padding), (padding, padding)),
        dimension_numbers=("NCHW", "OIHW", "NCHW"),
    ) + bias.reshape(1, -1, 1, 1)

    assert out.shape == (2, output_dim, 16, 16), out.shape
    max_err = float(jnp.max(jnp.abs(out - ref)))
    assert max_err < 5e-2, f"mismatch vs reference: max abs err {max_err}"

    print("KERNEL_OK")
</pallas_src>

<mosaic_0001>
module attributes {stable_mosaic.version = 11 : i64} {
  func.func @_conv_fused_kernel(%arg0: i32, %arg1: memref<1x4x342xbf16, #tpu.memory_space<vmem>>, %arg2: memref<8x36xf32, #tpu.memory_space<vmem>>, %arg3: memref<8x1xf32, #tpu.memory_space<vmem>>, %arg4: memref<1x8x288xf32, #tpu.memory_space<vmem>>, %arg5: memref<36x288xf32, #tpu.memory_space<vmem>>) attributes {dimension_semantics = [#tpu.dimension_semantics<parallel>], iteration_bounds = array<i64: 2>, scalar_prefetch = 0 : i64, scratch_operands = 1 : i64, tpu.core_type = #tpu.core_type<tc>, window_params = [{transform_indices = @transform_0, window_bounds = array<i64: 1, 4, 342>}, {pipeline_mode = #tpu.pipeline_mode<synchronous>, transform_indices = @transform_1, window_bounds = array<i64: 8, 36>}, {pipeline_mode = #tpu.pipeline_mode<synchronous>, transform_indices = @transform_2, window_bounds = array<i64: 8, 1>}, {transform_indices = @transform_3, window_bounds = array<i64: 1, 8, 288>}]} {
    %c0 = arith.constant 0 : index
    %c0_0 = arith.constant 0 : index
    %c0_1 = arith.constant 0 : index
    %0 = vector.load %arg1[%c0, %c0_0, %c0_1] : memref<1x4x342xbf16, #tpu.memory_space<vmem>>, vector<1x4x288xbf16>
    %1 = vector.shape_cast %0 : vector<1x4x288xbf16> to vector<4x288xbf16>
    %2 = arith.extf %1 : vector<4x288xbf16> to vector<4x288xf32>
    %c0_2 = arith.constant 0 : index
    %c0_3 = arith.constant 0 : index
    %3 = vector.load %arg5[%c0_2, %c0_3] : memref<36x288xf32, #tpu.memory_space<vmem>>, vector<4x288xf32>
    tpu.vector_store %arg5[%c0_2, %c0_3], %2 {strides = array<i32>} : memref<36x288xf32, #tpu.memory_space<vmem>>, vector<4x288xf32>,
    %c0_4 = arith.constant 0 : index
    %c0_5 = arith.constant 0 : index
    %c1 = arith.constant 1 : index
    %4 = vector.load %arg1[%c0_4, %c0_5, %c1] : memref<1x4x342xbf16, #tpu.memory_space<vmem>>, vector<1x4x288xbf16>
    %5 = vector.shape_cast %4 : vector<1x4x288xbf16> to vector<4x288xbf16>
    %6 = arith.extf %5 : vector<4x288xbf16> to vector<4x288xf32>
    %c4 = arith.constant 4 : index
    %c0_6 = arith.constant 0 : index
    %7 = vector.load %arg5[%c4, %c0_6] : memref<36x288xf32, #tpu.memory_space<vmem>>, vector<4x288xf32>
    tpu.vector_store %arg5[%c4, %c0_6], %6 {strides = array<i32>} : memref<36x288xf32, #tpu.memory_space<vmem>>, vector<4x288xf32>,
    %c0_7 = arith.constant 0 : index
    %c0_8 = arith.constant 0 : index
    %c2 = arith.constant 2 : index
    %8 = vector.load %arg1[%c0_7, %c0_8, %c2] : memref<1x4x342xbf16, #tpu.memory_space<vmem>>, vector<1x4x288xbf16>
    %9 = vector.shape_cast %8 : vector<1x4x288xbf16> to vector<4x288xbf16>
    %10 = arith.extf %9 : vector<4x288xbf16> to vector<4x288xf32>
    %c8 = arith.constant 8 : index
    %c0_9 = arith.constant 0 : index
    %11 = vector.load %arg5[%c8, %c0_9] : memref<36x288xf32, #tpu.memory_space<vmem>>, vector<4x288xf32>
    tpu.vector_store %arg5[%c8, %c0_9], %10 {strides = array<i32>} : memref<36x288xf32, #tpu.memory_space<vmem>>, vector<4x288xf32>,
    %c0_10 = arith.constant 0 : index
    %c0_11 = arith.constant 0 : index
    %c18 = arith.constant 18 : index
    %12 = vector.load %arg1[%c0_10, %c0_11, %c18] : memref<1x4x342xbf16, #tpu.memory_space<vmem>>, vector<1x4x288xbf16>
    %13 = vector.shape_cast %12 : vector<1x4x288xbf16> to vector<4x288xbf16>
    %14 = arith.extf %13 : vector<4x288xbf16> to vector<4x288xf32>
    %c12 = arith.constant 12 : index
    %c0_12 = arith.constant 0 : index
    %15 = vector.load %arg5[%c12, %c0_12] : memref<36x288xf32, #tpu.memory_space<vmem>>, vector<4x288xf32>
    tpu.vector_store %arg5[%c12, %c0_12], %14 {strides = array<i32>} : memref<36x288xf32, #tpu.memory_space<vmem>>, vector<4x288xf32>,
    %c0_13 = arith.constant 0 : index
    %c0_14 = arith.constant 0 : index
    %c19 = arith.constant 19 : index
    %16 = vector.load %arg1[%c0_13, %c0_14, %c19] : memref<1x4x342xbf16, #tpu.memory_space<vmem>>, vector<1x4x288xbf16>
    %17 = vector.shape_cast %16 : vector<1x4x288xbf16> to vector<4x288xbf16>
    %18 = arith.extf %17 : vector<4x288xbf16> to vector<4x288xf32>
    %c16 = arith.constant 16 : index
    %c0_15 = arith.constant 0 : index
    %19 = vector.load %arg5[%c16, %c0_15] : memref<36x288xf32, #tpu.memory_space<vmem>>, vector<4x288xf32>
    tpu.vector_store %arg5[%c16, %c0_15], %18 {strides = array<i32>} : memref<36x288xf32, #tpu.memory_space<vmem>>, vector<4x288xf32>,
    %c0_16 = arith.constant 0 : index
    %c0_17 = arith.constant 0 : index
    %c20 = arith.constant 20 : index
    %20 = vector.load %arg1[%c0_16, %c0_17, %c20] : memref<1x4x342xbf16, #tpu.memory_space<vmem>>, vector<1x4x288xbf16>
    %21 = vector.shape_cast %20 : vector<1x4x288xbf16> to vector<4x288xbf16>
    %22 = arith.extf %21 : vector<4x288xbf16> to vector<4x288xf32>
    %c20_18 = arith.constant 20 : index
    %c0_19 = arith.constant 0 : index
    %23 = vector.load %arg5[%c20_18, %c0_19] : memref<36x288xf32, #tpu.memory_space<vmem>>, vector<4x288xf32>
    tpu.vector_store %arg5[%c20_18, %c0_19], %22 {strides = array<i32>} : memref<36x288xf32, #tpu.memory_space<vmem>>, vector<4x288xf32>,
    %c0_20 = arith.constant 0 : index
    %c0_21 = arith.constant 0 : index
    %c36 = arith.constant 36 : index
    %24 = vector.load %arg1[%c0_20, %c0_21, %c36] : memref<1x4x342xbf16, #tpu.memory_space<vmem>>, vector<1x4x288xbf16>
    %25 = vector.shape_cast %24 : vector<1x4x288xbf16> to vector<4x288xbf16>
    %26 = arith.extf %25 : vector<4x288xbf16> to vector<4x288xf32>
    %c24 = arith.constant 24 : index
    %c0_22 = arith.constant 0 : index
    %27 = vector.load %arg5[%c24, %c0_22] : memref<36x288xf32, #tpu.memory_space<vmem>>, vector<4x288xf32>
    tpu.vector_store %arg5[%c24, %c0_22], %26 {strides = array<i32>} : memref<36x288xf32, #tpu.memory_space<vmem>>, vector<4x288xf32>,
    %c0_23 = arith.constant 0 : index
    %c0_24 = arith.constant 0 : index
    %c37 = arith.constant 37 : index
    %28 = vector.load %arg1[%c0_23, %c0_24, %c37] : memref<1x4x342xbf16, #tpu.memory_space<vmem>>, vector<1x4x288xbf16>
    %29 = vector.shape_cast %28 : vector<1x4x288xbf16> to vector<4x288xbf16>
    %30 = arith.extf %29 : vector<4x288xbf16> to vector<4x288xf32>
    %c28 = arith.constant 28 : index
    %c0_25 = arith.constant 0 : index
    %31 = vector.load %arg5[%c28, %c0_25] : memref<36x288xf32, #tpu.memory_space<vmem>>, vector<4x288xf32>
    tpu.vector_store %arg5[%c28, %c0_25], %30 {strides = array<i32>} : memref<36x288xf32, #tpu.memory_space<vmem>>, vector<4x288xf32>,
    %c0_26 = arith.constant 0 : index
    %c0_27 = arith.constant 0 : index
    %c38 = arith.constant 38 : index
    %32 = vector.load %arg1[%c0_26, %c0_27, %c38] : memref<1x4x342xbf16, #tpu.memory_space<vmem>>, vector<1x4x288xbf16>
    %33 = vector.shape_cast %32 : vector<1x4x288xbf16> to vector<4x288xbf16>
    %34 = arith.extf %33 : vector<4x288xbf16> to vector<4x288xf32>
    %c32 = arith.constant 32 : index
    %c0_28 = arith.constant 0 : index
    %35 = vector.load %arg5[%c32, %c0_28] : memref<36x288xf32, #tpu.memory_space<vmem>>, vector<4x288xf32>
    tpu.vector_store %arg5[%c32, %c0_28], %34 {strides = array<i32>} : memref<36x288xf32, #tpu.memory_space<vmem>>, vector<4x288xf32>,
    %c0_29 = arith.constant 0 : index
    %c0_30 = arith.constant 0 : index
    %36 = vector.load %arg2[%c0_29, %c0_30] : memref<8x36xf32, #tpu.memory_space<vmem>>, vector<8x36xf32>
    %c0_31 = arith.constant 0 : index
    %c0_32 = arith.constant 0 : index
    %37 = vector.load %arg5[%c0_31, %c0_32] : memref<36x288xf32, #tpu.memory_space<vmem>>, vector<36x288xf32>
    %cst = arith.constant dense<0.000000e+00> : vector<8x288xf32>
    %38 = tpu.matmul %36, %37, %cst {dimension_numbers = #tpu.dot_dimension_numbers<[1], [0], [0], [1], [0, 0, 1, 1], [], []>} : vector<8x36xf32>, vector<36x288xf32>, vector<8x288xf32> -> vector<8x288xf32>
    %c0_33 = arith.constant 0 : index
    %c0_34 = arith.constant 0 : index
    %39 = vector.load %arg3[%c0_33, %c0_34] : memref<8x1xf32, #tpu.memory_space<vmem>>, vector<8x1xf32>
    %40 = vector.broadcast %39 : vector<8x1xf32> to vector<8x288xf32>
    %41 = arith.addf %38, %40 : vector<8x288xf32>
    %c0_35 = arith.constant 0 : index
    %c0_36 = arith.constant 0 : index
    %c0_37 = arith.constant 0 : index
    %42 = vector.load %arg4[%c0_35, %c0_36, %c0_37] : memref<1x8x288xf32, #tpu.memory_space<vmem>>, vector<1x8x288xf32>
    %43 = vector.shape_cast %42 : vector<1x8x288xf32> to vector<8x288xf32>
    %44 = vector.shape_cast %41 : vector<8x288xf32> to vector<1x8x288xf32>
    tpu.vector_store %arg4[%c0_35, %c0_36, %c0_37], %44 {strides = array<i32>} : memref<1x8x288xf32, #tpu.memory_space<vmem>>, vector<1x8x288xf32>,
    return
  }
  func.func @transform_0(%arg0: i32) -> (i32, i32, i32) {
    %c0_i32 = arith.constant 0 : i32
    %c0_i32_0 = arith.constant 0 : i32
    %c0_i32_1 = arith.constant 0 : i32
    return %arg0, %c0_i32, %c0_i32_0 : i32, i32, i32
  }
  func.func @transform_1(%arg0: i32) -> (i32, i32) {
    %c0_i32 = arith.constant 0 : i32
    %c0_i32_0 = arith.constant 0 : i32
    %c0_i32_1 = arith.constant 0 : i32
    return %c0_i32, %c0_i32_0 : i32, i32
  }
  func.func @transform_2(%arg0: i32) -> (i32, i32) {
    %c0_i32 = arith.constant 0 : i32
    %c0_i32_0 = arith.constant 0 : i32
    %c0_i32_1 = arith.constant 0 : i32
    return %c0_i32, %c0_i32_0 : i32, i32
  }
  func.func @transform_3(%arg0: i32) -> (i32, i32, i32) {
    %c0_i32 = arith.constant 0 : i32
    %c0_i32_0 = arith.constant 0 : i32
    %c0_i32_1 = arith.constant 0 : i32
    return %arg0, %c0_i32, %c0_i32_0 : i32, i32, i32
  }
}

</mosaic_0001>

<llo_original>
// kernel: my_convo2d_forward.1
$region0: #{my_convo2d_forward.1}
  #allocation0 [shape = 'u32[]', space=smem, size = 0x4, offset = 0x4, fixed_abs, tag = 'smem constant byte address 0x4 - core index']
  #allocation1 [shape = 'u32[144,128]{1,0:T(1,128)}', space=vmem, size = 0x12000, scoped, tag = 'internal scratch']
  #allocation2 [shape = 'f32[36,288]{1,0:T(8,128)}', space=vmem, size = 0xf000, scoped, tag = 'scratch operand']
  %s0 = inlined_call_operand.vmem [shape: bf16[2,4,342], index: 0, kind: input, shape index: {}]
  %s1 = inlined_call_operand.vmem [shape: f32[8,36], index: 1, kind: input, shape index: {}]
  %s2 = inlined_call_operand.vmem [shape: f32[8,1], index: 2, kind: input, shape index: {}]
  %s3 = inlined_call_operand.vmem [shape: f32[2,8,288], index: 3, kind: output, shape index: {}]
  %s4 = sld [smem:[#allocation0]]
  $region45: #{my_convo2d_forward.1} parent=0
    _
  %s6 = ssub.s32 1, %s4
  %s7 = scalar_select 0, %s6, %s4
  loop: start=0, step=1, limit=4
  $region2: #{my_convo2d_forward.1} parent=0 // loop_pre_header
    _
  $region3: #{my_convo2d_forward.1} parent=0 // loop_header
    %s9 = sphi 0, %s13
    %p10 = scmp.ge.s32.totalorder %s9, 4
    %s19 = sphi 0, %s21
    %s22 = sphi 0, %s19
    %s23 = sphi 0, %s22
    %s39 = sphi 0, %s23
    %s43 = sphi 0, %s43
    %s45 = sphi 0, %s43
    %s46 = sphi 0, %s45
    %s60 = sphi 0, %s46
    %s64 = sphi 0, %s64
    %s66 = sphi 0, %s64
    %s67 = sphi 0, %s66
    %s81 = sphi 0, %s67
    %s87 = sphi 0, %s89
    %s90 = sphi 0, %s87
    %s91 = sphi 0, %s90
    %s107 = sphi 0, %s91
  $region4: #{my_convo2d_forward.1} parent=0 // loop_header_branch
    %12 = sbr.rel (%p10) target = $region8
  $region5: #{my_convo2d_forward.1} parent=0 // loop_body
    %s14 = ssub.s32 %s9, 1
    %s15 = ssub.s32 %s9, 2
    %s16 = sadd.s32 %s9, 1
    %s17 = ssub.s32 %s9, %s16
    %p18 = scmp.eq.s32.totalorder %s17, 0
    %s20 = sadd.s32 %s19, 1
    %s21 = scalar_select %p18, %s19, %s20
    %p24 = pneg %p18
    %p25 = scmp.eq.s32.totalorder %s9, 1
    %p26 = por %p24, %p25
    %p27 = scmp.ne.s32.totalorder %s19, %s22
    %p28 = scmp.eq.s32.totalorder %s9, 0
    %p29 = por %p27, %p28
    %p30 = scmp.ne.s32.totalorder %s19, %s22
    %p31 = scmp.eq.s32.totalorder %s14, 1
    %p32 = por %p30, %p31
    %p33 = scmp.ne.s32.totalorder %s22, %s23
    %p34 = scmp.eq.s32.totalorder %s14, 0
    %p35 = por %p33, %p34
    %p36 = scmp.ne.s32.totalorder %s22, %s23
    %p37 = scmp.eq.s32.totalorder %s15, 1
    %p38 = por %p36, %p37
    %p40 = scmp.ne.s32.totalorder %s23, %s39
    %p41 = scmp.eq.s32.totalorder %s15, 0
    %p42 = por %p40, %p41
    %s44 = sadd.s32 %s43, 1
    %p47 = scmp.eq.s32.totalorder %s9, 1
    %p48 = scmp.ne.s32.totalorder %s43, %s45
    %p49 = scmp.eq.s32.totalorder %s9, 0
    %p50 = por %p48, %p49
    %p51 = scmp.ne.s32.totalorder %s43, %s45
    %p52 = scmp.eq.s32.totalorder %s14, 1
    %p53 = por %p51, %p52
    %p54 = scmp.ne.s32.totalorder %s45, %s46
    %p55 = scmp.eq.s32.totalorder %s14, 0
    %p56 = por %p54, %p55
    %p57 = scmp.ne.s32.totalorder %s45, %s46
    %p58 = scmp.eq.s32.totalorder %s15, 1
    %p59 = por %p57, %p58
    %p61 = scmp.ne.s32.totalorder %s46, %s60
    %p62 = scmp.eq.s32.totalorder %s15, 0
    %p63 = por %p61, %p62
    %s65 = sadd.s32 %s64, 1
    %p68 = scmp.eq.s32.totalorder %s9, 1
    %p69 = scmp.ne.s32.totalorder %s64, %s66
    %p70 = scmp.eq.s32.totalorder %s9, 0
    %p71 = por %p69, %p70
    %p72 = scmp.ne.s32.totalorder %s64, %s66
    %p73 = scmp.eq.s32.totalorder %s14, 1
    %p74 = por %p72, %p73
    %p75 = scmp.ne.s32.totalorder %s66, %s67
    %p76 = scmp.eq.s32.totalorder %s14, 0
    %p77 = por %p75, %p76
    %p78 = scmp.ne.s32.totalorder %s66, %s67
    %p79 = scmp.eq.s32.totalorder %s15, 1
    %p80 = por %p78, %p79
    %p82 = scmp.ne.s32.totalorder %s67, %s81
    %p83 = scmp.eq.s32.totalorder %s15, 0
    %p84 = por %p82, %p83
    %s85 = ssub.s32 %s9, %s16
    %p86 = scmp.eq.s32.totalorder %s85, 0
    %s88 = sadd.s32 %s87, 1
    %s89 = scalar_select %p86, %s87, %s88
    %p92 = pneg %p86
    %p93 = scmp.eq.s32.totalorder %s9, 1
    %p94 = por %p92, %p93
    %p95 = scmp.ne.s32.totalorder %s87, %s90
    %p96 = scmp.eq.s32.totalorder %s9, 0
    %p97 = por %p95, %p96
    %p98 = scmp.ne.s32.totalorder %s87, %s90
    %p99 = scmp.eq.s32.totalorder %s14, 1
    %p100 = por %p98, %p99
    %p101 = scmp.ne.s32.totalorder %s90, %s91
    %p102 = scmp.eq.s32.totalorder %s14, 0
    %p103 = por %p101, %p102
    %p104 = scmp.ne.s32.totalorder %s90, %s91
    %p105 = scmp.eq.s32.totalorder %s15, 1
    %p106 = por %p104, %p105
    %p108 = scmp.ne.s32.totalorder %s91, %s107
    %p109 = scmp.eq.s32.totalorder %s15, 0
    %p110 = por %p108, %p109
    %p111 = scmp.le.s32.totalorder 1, %s9
    %p112 = scmp.lt.s32.totalorder %s9, 3
    %p113 = pnand %p111, %p112
    %p114 = pneg %p113
    // Predicated region
    $region9: #{my_convo2d_forward.1} parent=5 // pred_check
      _
    $region10: #{my_convo2d_forward.1} parent=5 // pred_check_branch
      %116 = sbr.rel (%p113) target = $region12
    $region11: #{my_convo2d_forward.1} parent=5 // pred_region
      %s117 = ssub.s32 %s9, 1
      // Predicated region
      $region13: #{my_convo2d_forward.1} parent=11 // pred_check
        %p118 = pneg %p56
      $region14: #{my_convo2d_forward.1} parent=11 // pred_check_branch
        %120 = sbr.rel (%p118) target = $region16
      $region15: #{my_convo2d_forward.1} parent=11 // pred_region
        _
      $region16: #{my_convo2d_forward.1} parent=11 // pred_fallthru
        _
      // Predicated region
      $region17: #{my_convo2d_forward.1} parent=11 // pred_check
        %p121 = pneg %p77
      $region18: #{my_convo2d_forward.1} parent=11 // pred_check_branch
        %123 = sbr.rel (%p121) target = $region20
      $region19: #{my_convo2d_forward.1} parent=11 // pred_region
        _
      $region20: #{my_convo2d_forward.1} parent=11 // pred_fallthru
        _
    $region12: #{my_convo2d_forward.1} parent=5 // pred_fallthru
      _
    %p124 = scmp.lt.s32.totalorder %s9, 2
    // Predicated region
    $region21: #{my_convo2d_forward.1} parent=5 // pred_check
      %p125 = pneg %p124
    $region22: #{my_convo2d_forward.1} parent=5 // pred_check_branch
      %127 = sbr.rel (%p125) target = $region24
    $region23: #{my_convo2d_forward.1} parent=5 // pred_region
      // Predicated region
      $region25: #{my_convo2d_forward.1} parent=23 // pred_check
        %p128 = pneg %p29
      $region26: #{my_convo2d_forward.1} parent=23 // pred_check_branch
        %130 = sbr.rel (%p128) target = $region28
      $region27: #{my_convo2d_forward.1} parent=23 // pred_region
        %p131 = scmp.lt.s32.totalorder %s9, 1
        %s132 = scalar_select %p131, %s9, 1
        %s133 = smul.addr %s132, 3
        %s134 = smul.addr %s133, 2
        %s135 = scalar_lea.vmem %s0, %s134
      $region28: #{my_convo2d_forward.1} parent=23 // pred_fallthru
        _
    $region24: #{my_convo2d_forward.1} parent=5 // pred_fallthru
      _
    %p136 = scmp.le.s32.totalorder 1, %s9
    %p137 = scmp.lt.s32.totalorder %s9, 3
    %p138 = pnand %p136, %p137
    %p139 = pneg %p138
    // Predicated region
    $region29: #{my_convo2d_forward.1} parent=5 // pred_check
      _
    $region30: #{my_convo2d_forward.1} parent=5 // pred_check_branch
      %141 = sbr.rel (%p138) target = $region32
    $region31: #{my_convo2d_forward.1} parent=5 // pred_region
      %s142 = ssub.s32 %s9, 1
      %p143 = scmp.lt.s32.totalorder %s14, 1
      %s144 = scalar_select %p143, %s14, 1
      %s145 = smul.addr %s144, 3
      %s146 = smul.addr %s145, 2
      %s147 = scalar_lea.vmem %s0, %s146
      %p148 = pneg %p35
      %p149 = pneg %p32
      %p150 = pneg %p56
      %p151 = pneg %p53
      %p152 = pneg %p77
      %p153 = pneg %p74
      %p154 = pneg %p103
      %p155 = pneg %p100
      %p156 = scmp.lt.s32.totalorder %s14, 1
      %s157 = scalar_select %p156, %s14, 1
      %s158 = smul.addr %s157, 3
      %s159 = smul.addr %s158, 8
      %s160 = scalar_lea.vmem %s3, %s159
      %p161 = scmp.lt.s32.totalorder %s14, 1
      %s162 = scalar_select %p161, %s14, 1
      %s163 = smul.addr %s162, 3
      %s164 = smul.addr %s163, 2
      %s165 = scalar_lea.vmem %s0, %s164
      %p166 = scmp.lt.s32.totalorder %s14, 1
      %s167 = scalar_select %p166, %s14, 1
      %s168 = smul.addr %s167, 3
      %s169 = smul.addr %s168, 8
      %s170 = scalar_lea.vmem %s3, %s169
      %v171 = vld [vmem:[%s165] sm:$0x3f]
      %v172 = vunpack.c.l.bf16 %v171
      %v173 = vunpack.c.h.bf16 %v171
      %v175 = vcombine.high %v172, %v172
      %177 = vst [vmem:[#allocation2] sm:$0xf] %v172
      %178 = vst [vmem:[#allocation2 + $0x8] sm:$0xf] %v175
      %vm179 = vcmask 257024
      %180 = vst.msk [vmem:[#allocation2 + $0x10] sm:$0xf] %vm179, %v173
      %v181 = vld [vmem:[%s165] sm:$0x3f]
      %v182 = vunpack.c.l.bf16 %v181
      %v183 = vunpack.c.h.bf16 %v181
      %v186 = vcombine.low %v182, %v182
      %v187 = vcombine.low %v183, %v183
      %188 = vrot.lane.b32.xlu0 %v186, 127
      %v189 = vpop.permute.xlu0 %188
      %190 = vrot.lane.b32.xlu0 %v182, 127
      %v191 = vpop.permute.xlu0 %190
      %192 = vrot.lane.b32.xlu0 %v187, 127
      %v193 = vpop.permute.xlu0 %192
      %vm194 = vcmask 1039360
      %v195 = vsel %vm194, %v189, %v191
      %v196 = vsel %vm194, %v191, %v193
      %200 = vst [vmem:[#allocation2] sm:$0xf0] %v195
      %201 = vst [vmem:[#allocation2 + $0x8] sm:$0xf0] %v196
      %vm202 = vcmask 261124
      %203 = vst.msk [vmem:[#allocation2 + $0x10] sm:$0xf0] %vm202, %v193
      %v204 = vld [vmem:[%s165] sm:$0x3f]
      %v205 = vunpack.c.l.bf16 %v204
      %v206 = vunpack.c.h.bf16 %v204
      %v209 = vcombine.high %v205, %v205
      %210 = vrot.lane.b32.xlu0 %v205, 126
      %v211 = vpop.permute.xlu0 %210
      %212 = vrot.lane.b32.xlu0 %v209, 126
      %v213 = vpop.permute.xlu0 %212
      %214 = vrot.lane.b32.xlu0 %v206, 126
      %v215 = vpop.permute.xlu0 %214
      %vm216 = vcmask 1031168
      %v217 = vsel %vm216, %v211, %v213
      %v218 = vsel %vm216, %v213, %v215
      %222 = vst [vmem:[#allocation2 + $0x18] sm:$0xf] %v217
      %223 = vst [vmem:[#allocation2 + $0x20] sm:$0xf] %v218
      %224 = vst.msk [vmem:[#allocation2 + $0x28] sm:$0xf] %vm179, %v215
      %v225 = vld [vmem:[%s165] sm:$0x3f]
      %v226 = vunpack.c.l.bf16 %v225
      %v227 = vunpack.c.h.bf16 %v225
      %v230 = vcombine.low %v226, %v226
      %v231 = vcombine.low %v227, %v227
      %232 = vrot.lane.b32.xlu0 %v230, 110
      %v233 = vpop.permute.xlu0 %232
      %234 = vrot.lane.b32.xlu0 %v226, 110
      %v235 = vpop.permute.xlu0 %234
      %236 = vrot.lane.b32.xlu0 %v231, 110
      %v237 = vpop.permute.xlu0 %236
      %vm238 = vcmask 900096
      %v239 = vsel %vm238, %v233, %v235
      %v240 = vsel %vm238, %v235, %v237
      %244 = vst [vmem:[#allocation2 + $0x18] sm:$0xf0] %v239
      %245 = vst [vmem:[#allocation2 + $0x20] sm:$0xf0] %v240
      %246 = vst.msk [vmem:[#allocation2 + $0x28] sm:$0xf0] %vm202, %v237
      %v247 = vld [vmem:[%s165] sm:$0x3f]
      %v248 = vunpack.c.l.bf16 %v247
      %v249 = vunpack.c.h.bf16 %v247
      %v252 = vcombine.high %v248, %v248
      %253 = vrot.lane.b32.xlu0 %v248, 109
      %v254 = vpop.permute.xlu0 %253
      %255 = vrot.lane.b32.xlu0 %v252, 109
      %v256 = vpop.permute.xlu0 %255
      %257 = vrot.lane.b32.xlu0 %v249, 109
      %v258 = vpop.permute.xlu0 %257
      %vm259 = vcmask 891904
      %v260 = vsel %vm259, %v254, %v256
      %v261 = vsel %vm259, %v256, %v258
      %265 = vst [vmem:[#allocation2 + $0x30] sm:$0xf] %v260
      %266 = vst [vmem:[#allocation2 + $0x38] sm:$0xf] %v261
      %267 = vst.msk [vmem:[#allocation2 + $0x40] sm:$0xf] %vm179, %v258
      %v268 = vld [vmem:[%s165] sm:$0x3f]
      %v269 = vunpack.c.l.bf16 %v268
      %v270 = vunpack.c.h.bf16 %v268
      %v273 = vcombine.low %v269, %v269
      %v274 = vcombine.low %v270, %v270
      %275 = vrot.lane.b32.xlu0 %v273, 108
      %v276 = vpop.permute.xlu0 %275
      %277 = vrot.lane.b32.xlu0 %v269, 108
      %v278 = vpop.permute.xlu0 %277
      %279 = vrot.lane.b32.xlu0 %v274, 108
      %v280 = vpop.permute.xlu0 %279
      %vm281 = vcmask 883712
      %v282 = vsel %vm281, %v276, %v278
      %v283 = vsel %vm281, %v278, %v280
      %287 = vst [vmem:[#allocation2 + $0x30] sm:$0xf0] %v282
      %288 = vst [vmem:[#allocation2 + $0x38] sm:$0xf0] %v283
      %289 = vst.msk [vmem:[#allocation2 + $0x40] sm:$0xf0] %vm202, %v280
      %v290 = vld [vmem:[%s165] sm:$0x3f]
      %v291 = vunpack.c.l.bf16 %v290
      %v292 = vunpack.c.h.bf16 %v290
      %v295 = vcombine.high %v291, %v291
      %296 = vrot.lane.b32.xlu0 %v291, 92
      %v297 = vpop.permute.xlu0 %296
      %298 = vrot.lane.b32.xlu0 %v295, 92
      %v299 = vpop.permute.xlu0 %298
      %300 = vrot.lane.b32.xlu0 %v292, 92
      %v301 = vpop.permute.xlu0 %300
      %vm302 = vcmask 752640
      %v303 = vsel %vm302, %v297, %v299
      %v304 = vsel %vm302, %v299, %v301
      %308 = vst [vmem:[#allocation2 + $0x48] sm:$0xf] %v303
      %309 = vst [vmem:[#allocation2 + $0x50] sm:$0xf] %v304
      %310 = vst.msk [vmem:[#allocation2 + $0x58] sm:$0xf] %vm179, %v301
      %v311 = vld [vmem:[%s165] sm:$0x3f]
      %v312 = vunpack.c.l.bf16 %v311
      %v313 = vunpack.c.h.bf16 %v311
      %v316 = vcombine.low %v312, %v312
      %v317 = vcombine.low %v313, %v313
      %318 = vrot.lane.b32.xlu0 %v316, 91
      %v319 = vpop.permute.xlu0 %318
      %320 = vrot.lane.b32.xlu0 %v312, 91
      %v321 = vpop.permute.xlu0 %320
      %322 = vrot.lane.b32.xlu0 %v317, 91
      %v323 = vpop.permute.xlu0 %322
      %vm324 = vcmask 744448
      %v325 = vsel %vm324, %v319, %v321
      %v326 = vsel %vm324, %v321, %v323
      %330 = vst [vmem:[#allocation2 + $0x48] sm:$0xf0] %v325
      %331 = vst [vmem:[#allocation2 + $0x50] sm:$0xf0] %v326
      %332 = vst.msk [vmem:[#allocation2 + $0x58] sm:$0xf0] %vm202, %v323
      %v333 = vld [vmem:[%s165] sm:$0x3f]
      %v334 = vunpack.c.l.bf16 %v333
      %v335 = vunpack.c.h.bf16 %v333
      %v338 = vcombine.high %v334, %v334
      %339 = vrot.lane.b32.xlu0 %v334, 90
      %v340 = vpop.permute.xlu0 %339
      %341 = vrot.lane.b32.xlu0 %v338, 90
      %v342 = vpop.permute.xlu0 %341
      %343 = vrot.lane.b32.xlu0 %v335, 90
      %v344 = vpop.permute.xlu0 %343
      %vm345 = vcmask 736256
      %v346 = vsel %vm345, %v340, %v342
      %v347 = vsel %vm345, %v342, %v344
      %351 = vst [vmem:[#allocation2 + $0x60] sm:$0xf] %v346
      %352 = vst [vmem:[#allocation2 + $0x68] sm:$0xf] %v347
      %353 = vst.msk [vmem:[#allocation2 + $0x70] sm:$0xf] %vm179, %v344
      %v354 = vld [vmem:[%s1] sm:$0xff]
      %v355 = vld [vmem:[#allocation2] sm:$0xff]
      %v356 = vld [vmem:[#allocation2 + $0x8] sm:$0xff]
      %v357 = vld [vmem:[#allocation2 + $0x10] sm:$0xff]
      %v358 = vld [vmem:[#allocation2 + $0x18] sm:$0xff]
      %v359 = vld [vmem:[#allocation2 + $0x20] sm:$0xff]
      %v360 = vld [vmem:[#allocation2 + $0x28] sm:$0xff]
      %v361 = vld [vmem:[#allocation2 + $0x30] sm:$0xff]
      %v362 = vld [vmem:[#allocation2 + $0x38] sm:$0xff]
      %v363 = vld [vmem:[#allocation2 + $0x40] sm:$0xff]
      %v364 = vld [vmem:[#allocation2 + $0x48] sm:$0xff]
      %v365 = vld [vmem:[#allocation2 + $0x50] sm:$0xff]
      %v366 = vld [vmem:[#allocation2 + $0x58] sm:$0xff]
      %v367 = vld [vmem:[#allocation2 + $0x60] sm:$0xf]
      %v368 = vld [vmem:[#allocation2 + $0x68] sm:$0xf]
      %v369 = vld [vmem:[#allocation2 + $0x70] sm:$0xf]
      %v370 = vld [vmem:[%s2] sm:$0xff]
      %372 = vset.pattern.permute.xlu0 0
      %373 = vperm.xlu0 %372, %v370
      %v374 = vpop.permute.xlu0 %373
      %vm376 = vcmask 293888
      %v378 = vsel %vm376, %v354, 0
      %vm380 = vcmask 1043456
      %v382 = vsel %vm380, %v367, 0
      %v385 = vsel %vm380, %v368, 0
      %v388 = vsel %vm380, %v369, 0
      %390 = vmatprep.subr.mxu0 %v356
      %391 = vmatpush1.msra.mxu0 %v355
      %392 = vmatprep.subr.mxu0 %v359
      %393 = vmatpush1.msra.mxu0 %v358
      %394 = vmatprep.subr.mxu0 %v362
      %395 = vmatpush1.msra.mxu0 %v361
      %396 = vmatprep.subr.mxu0 %v365
      %397 = vmatpush1.msra.mxu0 %v364
      %398 = vmatprep.subr.mxu0 %v385
      %399 = vmatpush1.msra.mxu0 %v382
      %400 = vmatprep.subr.mxu0 0.0
      %401 = vmatpush1.msra.mxu0 0.0
      %402 = vmatprep.subr.mxu0 0.0
      %403 = vmatpush1.msra.mxu0 0.0
      %404 = vmatprep.subr.mxu0 0.0
      %405 = vmatpush1.msra.mxu0 0.0
      %406 = vmatprep.subr.mxu0 0.0
      %407 = vmatpush1.msra.mxu0 0.0
      %408 = vmatprep.subr.mxu0 0.0
      %409 = vmatpush1.msra.mxu0 0.0
      %410 = vmatprep.subr.mxu0 0.0
      %411 = vmatpush1.msra.mxu0 0.0
      %412 = vmatprep.subr.mxu0 0.0
      %413 = vmatpush1.msra.mxu0 0.0
      %414 = vmatprep.subr.mxu0 0.0
      %415 = vmatpush1.msra.mxu0 0.0
      %416 = vmatprep.subr.mxu0 0.0
      %417 = vmatpush1.msra.mxu0 0.0
      %418 = vmatprep.subr.mxu0 0.0
      %419 = vmatpush1.msra.mxu0 0.0
      %420 = vmatprep.subr.mxu0 0.0
      %421 = vmatpush1.msra.mxu0 0.0
      %422 = vmatprep.subr.mxu0 0.0
      %423 = vmatpush1.msra.mxu0 0.0
      %424 = vmatprep.subr.mxu0 0.0
      %425 = vmatpush1.msra.mxu0 0.0
      %426 = vmatprep.subr.mxu0 0.0
      %427 = vmatpush1.msra.mxu0 0.0
      %428 = vmatprep.subr.mxu0 0.0
      %429 = vmatpush1.msra.mxu0 0.0
      %430 = vmatprep.subr.mxu0 0.0
      %431 = vmatpush1.msra.mxu0 0.0
      %432 = vmatprep.subr.mxu0 0.0
      %433 = vmatpush1.msra.mxu0 0.0
      %434 = vmatprep.subr.mxu0 0.0
      %435 = vmatpush1.msra.mxu0 0.0
      %436 = vmatprep.subr.mxu0 0.0
      %437 = vmatpush1.msra.mxu0 0.0
      %438 = vmatprep.subr.mxu0 0.0
      %439 = vmatpush1.msra.mxu0 0.0
      %440 = vmatprep.subr.mxu0 0.0
      %441 = vmatpush1.msra.mxu0 0.0
      %442 = vmatprep.subr.mxu0 0.0
      %443 = vmatpush1.msra.mxu0 0.0
      %444 = vmatprep.subr.mxu0 0.0
      %445 = vmatpush1.msra.mxu0 0.0
      %446 = vmatprep.subr.mxu0 0.0
      %447 = vmatpush1.msra.mxu0 0.0
      %448 = vmatprep.subr.mxu0 0.0
      %449 = vmatpush1.msra.mxu0 0.0
      %450 = vmatprep.subr.mxu0 0.0
      %451 = vmatpush1.msra.mxu0 0.0
      %452 = vmatprep.subr.mxu0 0.0
      %453 = vmatpush1.msra.mxu0 0.0
      %454 = vmatprep.mubr.f32.mxu0 0.0
      %455 = vmatmul.mubr.f32.gmra.mrb[0].mxu0 %v378
      %v456 = vpop.f32.mrb[0].mxu0
      %v457 = vadd.f32 %v374, %v456
      %v458 = vpop.f32.mrb[0].mxu0
      %v459 = vadd.f32 %v374, %v458
      %460 = vdwg.mxu0
      %461 = vmatprep.subr.mxu0 0.0
      %462 = vmatpush1.msra.mxu0 %v357
      %463 = vmatprep.subr.mxu0 0.0
      %464 = vmatpush1.msra.mxu0 %v360
      %465 = vmatprep.subr.mxu0 0.0
      %466 = vmatpush1.msra.mxu0 %v363
      %467 = vmatprep.subr.mxu0 0.0
      %468 = vmatpush1.msra.mxu0 %v366
      %469 = vmatprep.subr.mxu0 0.0
      %470 = vmatpush1.msra.mxu0 %v388
      %471 = vmatprep.subr.mxu0 0.0
      %472 = vmatpush1.msra.mxu0 0.0
      %473 = vmatprep.subr.mxu0 0.0
      %474 = vmatpush1.msra.mxu0 0.0
      %475 = vmatprep.subr.mxu0 0.0
      %476 = vmatpush1.msra.mxu0 0.0
      %477 = vmatprep.subr.mxu0 0.0
      %478 = vmatpush1.msra.mxu0 0.0
      %479 = vmatprep.subr.mxu0 0.0
      %480 = vmatpush1.msra.mxu0 0.0
      %481 = vmatprep.subr.mxu0 0.0
      %482 = vmatpush1.msra.mxu0 0.0
      %483 = vmatprep.subr.mxu0 0.0
      %484 = vmatpush1.msra.mxu0 0.0
      %485 = vmatprep.subr.mxu0 0.0
      %486 = vmatpush1.msra.mxu0 0.0
      %487 = vmatprep.subr.mxu0 0.0
      %488 = vmatpush1.msra.mxu0 0.0
      %489 = vmatprep.subr.mxu0 0.0
      %490 = vmatpush1.msra.mxu0 0.0
      %491 = vmatprep.subr.mxu0 0.0
      %492 = vmatpush1.msra.mxu0 0.0
      %493 = vmatprep.subr.mxu0 0.0
      %494 = vmatpush1.msra.mxu0 0.0
      %495 = vmatprep.subr.mxu0 0.0
      %496 = vmatpush1.msra.mxu0 0.0
      %497 = vmatprep.subr.mxu0 0.0
      %498 = vmatpush1.msra.mxu0 0.0
      %499 = vmatprep.subr.mxu0 0.0
      %500 = vmatpush1.msra.mxu0 0.0
      %501 = vmatprep.subr.mxu0 0.0
      %502 = vmatpush1.msra.mxu0 0.0
      %503 = vmatprep.subr.mxu0 0.0
      %504 = vmatpush1.msra.mxu0 0.0
      %505 = vmatprep.subr.mxu0 0.0
      %506 = vmatpush1.msra.mxu0 0.0
      %507 = vmatprep.subr.mxu0 0.0
      %508 = vmatpush1.msra.mxu0 0.0
      %509 = vmatprep.subr.mxu0 0.0
      %510 = vmatpush1.msra.mxu0 0.0
      %511 = vmatprep.subr.mxu0 0.0
      %512 = vmatpush1.msra.mxu0 0.0
      %513 = vmatprep.subr.mxu0 0.0
      %514 = vmatpush1.msra.mxu0 0.0
      %515 = vmatprep.subr.mxu0 0.0
      %516 = vmatpush1.msra.mxu0 0.0
      %517 = vmatprep.subr.mxu0 0.0
      %518 = vmatpush1.msra.mxu0 0.0
      %519 = vmatprep.subr.mxu0 0.0
      %520 = vmatpush1.msra.mxu0 0.0
      %521 = vmatprep.subr.mxu0 0.0
      %522 = vmatpush1.msra.mxu0 0.0
      %523 = vmatprep.subr.mxu0 0.0
      %524 = vmatpush1.msra.mxu0 0.0
      %525 = vmatprep.mubr.f32.mxu0 0.0
      %526 = vmatmul.mubr.f32.gmra.mrb[0].mxu0 %v378
      %v527 = vpop.f32.mrb[0].mxu0
      %v528 = vadd.f32 %v374, %v527
      %v529 = vpop.f32.mrb[0].mxu0
      %530 = vdwg.mxu0
      %531 = vst [vmem:[%s170] sm:$0xff] %v457
      %532 = vst [vmem:[%s170 + $0x8] sm:$0xff] %v459
      %vm533 = vcmask 261120
      %534 = vst.msk [vmem:[%s170 + $0x10] sm:$0xff] %vm533, %v528
      %p535 = scmp.lt.s32.totalorder %s14, 1
      %s536 = scalar_select %p535, %s14, 1
      %s537 = smul.addr %s536, 3
      %s538 = smul.addr %s537, 8
      %s539 = scalar_lea.vmem %s3, %s538
      // Predicated region
      $region33: #{my_convo2d_forward.1} parent=31 // pred_check
        %p540 = pneg %p100
      $region34: #{my_convo2d_forward.1} parent=31 // pred_check_branch
        %542 = sbr.rel (%p540) target = $region36
      $region35: #{my_convo2d_forward.1} parent=31 // pred_region
        _
      $region36: #{my_convo2d_forward.1} parent=31 // pred_fallthru
        _
    $region32: #{my_convo2d_forward.1} parent=5 // pred_fallthru
      _
    %p543 = scmp.le.s32.totalorder 2, %s9
    // Predicated region
    $region37: #{my_convo2d_forward.1} parent=5 // pred_check
      %p544 = pneg %p543
    $region38: #{my_convo2d_forward.1} parent=5 // pred_check_branch
      %546 = sbr.rel (%p544) target = $region40
    $region39: #{my_convo2d_forward.1} parent=5 // pred_region
      %s547 = ssub.s32 %s9, 2
      // Predicated region
      $region41: #{my_convo2d_forward.1} parent=39 // pred_check
        %p548 = pneg %p106
      $region42: #{my_convo2d_forward.1} parent=39 // pred_check_branch
        %550 = sbr.rel (%p548) target = $region44
      $region43: #{my_convo2d_forward.1} parent=39 // pred_region
        %p551 = scmp.lt.s32.totalorder %s15, 1
        %s552 = scalar_select %p551, %s15, 1
        %s553 = smul.addr %s552, 3
        %s554 = smul.addr %s553, 8
        %s555 = scalar_lea.vmem %s3, %s554
      $region44: #{my_convo2d_forward.1} parent=39 // pred_fallthru
        _
    $region40: #{my_convo2d_forward.1} parent=5 // pred_fallthru
      _
  $region6: #{my_convo2d_forward.1} parent=0 // loop_footer
    %s13 = sadd.s32 1, %s9
  $region7: #{my_convo2d_forward.1} parent=0 // loop_footer_branch
    %8 = sbr.rel target = $region3
  $region8: #{my_convo2d_forward.1} parent=0 // loop_exit
    _

</llo_original>
